<compile_context>
chip_gen: v6e
topology: v6e:2x2x1
jax: 0.10.0
libtpu: 0.0.40
codegen_flags: <defaults>
</compile_context>

<pallas_src>
import jax
import jax.numpy as jnp
from jax.experimental import pallas as pl
from jax.experimental.pallas import tpu as pltpu

BN_EPS = 1e-5


def _round_up(n, m):
    return ((n + m - 1) // m) * m


def _mlp_kernel(x_ref, w1_ref, b1_ref, w2_ref, b2_ref, w3_ref, b3_ref, o_ref):
    # fc1 (+ folded BN1) + relu   (dropout = identity in eval mode)
    h1 = jnp.dot(x_ref[...], w1_ref[...],
                 preferred_element_type=jnp.float32) + b1_ref[...]
    h1 = jnp.maximum(h1, 0.0)

    # fc2 (+ folded BN2) + relu
    h2 = jnp.dot(h1.astype(w2_ref.dtype), w2_ref[...],
                 preferred_element_type=jnp.float32) + b2_ref[...]
    h2 = jnp.maximum(h2, 0.0)

    # fc3: 1-column matmul replaced by VPU multiply + lane reduction (XLU),
    # avoids an MXU pass that would use <1/128 of the array width.
    w3_row = w3_ref[...].astype(jnp.float32)                  # (1, H2)
    o_ref[...] = (jnp.sum(h2 * w3_row, axis=-1, keepdims=True)
                  + b3_ref[...]).astype(o_ref.dtype)


def fold_bn_params(params, *, use_bf16=True):
    """Fold inference-mode BatchNorm into the preceding Linear layers."""
    inv1 = params["g1"] * jax.lax.rsqrt(params["v1"] + BN_EPS)      # (1, H)
    w1f = params["w1"] * inv1                                       # (D, H)
    b1f = (params["b1"] - params["m1"]) * inv1 + params["be1"]      # (1, H)

    inv2 = params["g2"] * jax.lax.rsqrt(params["v2"] + BN_EPS)      # (1, H2)
    w2f = params["w2"] * inv2                                       # (H, H2)
    b2f = (params["b2"] - params["m2"]) * inv2 + params["be2"]      # (1, H2)

    w3r = params["w3"].T                                            # (1, H2) row

    mat_dtype = jnp.bfloat16 if use_bf16 else jnp.float32
    return {
        "w1": w1f.astype(mat_dtype), "b1": b1f.astype(jnp.float32),
        "w2": w2f.astype(mat_dtype), "b2": b2f.astype(jnp.float32),
        "w3": w3r.astype(mat_dtype), "b3": params["b3"].astype(jnp.float32),
    }


def audio_sentiment_forward(x, params, *, tile_b=512, use_bf16=True):
    """x: (B, input_dim) float32. params: raw (un-folded) module params. Returns (B, 1) f32."""
    B, D = x.shape
    fp = fold_bn_params(params, use_bf16=use_bf16)
    H = fp["w1"].shape[1]
    H2 = fp["w2"].shape[1]

    # Batch tiling: single grid step for small B, otherwise tile_b-row tiles.
    # Round to 16 so bf16 sublane packing is always aligned.
    tb = min(tile_b, _round_up(B, 16))
    Bp = _round_up(B, tb)

    x_in = x.astype(jnp.bfloat16 if use_bf16 else jnp.float32)
    if Bp != B:
        x_in = jnp.pad(x_in, ((0, Bp - B), (0, 0)))

    grid = (Bp // tb,)

    def const_spec(r, c):       # parameters: same block every grid step
        return pl.BlockSpec((r, c), lambda i: (0, 0))

    out = pl.pallas_call(
        _mlp_kernel,
        out_shape=jax.ShapeDtypeStruct((Bp, 1), jnp.float32),
        grid_spec=pltpu.PrefetchScalarGridSpec(
            num_scalar_prefetch=0,
            grid=grid,
            in_specs=[
                pl.BlockSpec((tb, D), lambda i: (i, 0)),     # x tile
                const_spec(D, H),  const_spec(1, H),         # fc1 (BN folded)
                const_spec(H, H2), const_spec(1, H2),        # fc2 (BN folded)
                const_spec(1, H2), const_spec(1, 1),         # fc3 row + bias
            ],
            out_specs=pl.BlockSpec((tb, 1), lambda i: (i, 0)),
        ),
        compiler_params=pltpu.CompilerParams(
            dimension_semantics=("parallel",)),
    )(x_in, fp["w1"], fp["b1"], fp["w2"], fp["b2"], fp["w3"], fp["b3"])

    return out[:B]


def init_params(key, input_dim, hidden_dim=32):
    """Parameter init matching the module's shapes.
    Linear weights stored as (in, out); BN params as (1, features)."""
    h2 = hidden_dim // 2
    ks = jax.random.split(key, 12)
    s1 = 1.0 / jnp.sqrt(input_dim)
    s2 = 1.0 / jnp.sqrt(hidden_dim)
    s3 = 1.0 / jnp.sqrt(h2)
    return {
        # fc1
        "w1": jax.random.uniform(ks[0], (input_dim, hidden_dim), jnp.float32, -s1, s1),
        "b1": jax.random.uniform(ks[1], (1, hidden_dim), jnp.float32, -s1, s1),
        # batch_norm1 (gamma, beta, running_mean, running_var) — randomized to test folding
        "g1": jax.random.uniform(ks[2], (1, hidden_dim), jnp.float32, 0.8, 1.2),
        "be1": 0.1 * jax.random.normal(ks[3], (1, hidden_dim), jnp.float32),
        "m1": 0.1 * jax.random.normal(ks[4], (1, hidden_dim), jnp.float32),
        "v1": jax.random.uniform(ks[5], (1, hidden_dim), jnp.float32, 0.5, 1.5),
        # fc2
        "w2": jax.random.uniform(ks[6], (hidden_dim, h2), jnp.float32, -s2, s2),
        "b2": jax.random.uniform(ks[7], (1, h2), jnp.float32, -s2, s2),
        # batch_norm2
        "g2": jax.random.uniform(ks[8], (1, h2), jnp.float32, 0.8, 1.2),
        "be2": 0.1 * jax.random.normal(ks[9], (1, h2), jnp.float32),
        "m2": 0.1 * jax.random.normal(ks[10], (1, h2), jnp.float32),
        "v2": jax.random.uniform(ks[11], (1, h2), jnp.float32, 0.5, 1.5),
        # fc3
        "w3": jax.random.uniform(ks[0], (h2, 1), jnp.float32, -s3, s3),
        "b3": jax.random.uniform(ks[1], (1, 1), jnp.float32, -s3, s3),
    }


def reference_forward(x, p):
    """Pure f32 reference with PyTorch eval-mode semantics (un-folded BN)."""
    h1 = x @ p["w1"] + p["b1"]
    h1 = (h1 - p["m1"]) / jnp.sqrt(p["v1"] + BN_EPS) * p["g1"] + p["be1"]
    h1 = jnp.maximum(h1, 0.0)
    h2 = h1 @ p["w2"] + p["b2"]
    h2 = (h2 - p["m2"]) / jnp.sqrt(p["v2"] + BN_EPS) * p["g2"] + p["be2"]
    h2 = jnp.maximum(h2, 0.0)
    return h2 @ p["w3"] + p["b3"]


if __name__ == "__main__":
    key = jax.random.PRNGKey(0)
    kx, kp = jax.random.split(key)

    B, INPUT_DIM, HIDDEN = 16, 64, 32          # small shapes consistent with the module
    x = jax.random.normal(kx, (B, INPUT_DIM), jnp.float32)
    params = init_params(kp, INPUT_DIM, HIDDEN)

    out = audio_sentiment_forward(x, params)   # single grid step for this small B
    out = jax.block_until_ready(out)

    ref = reference_forward(x, params)
    assert out.shape == (B, 1), out.shape
    # bf16 matmul inputs with f32 accumulation -> compare against f32 reference
    # with a tolerance comfortably above bf16 quantization error.
    assert jnp.allclose(out, ref, atol=2e-2, rtol=2e-2), "mismatch vs reference"
    print("KERNEL_OK")
</pallas_src>

<mosaic_0001>
module attributes {stable_mosaic.version = 11 : i64} {
  func.func @_mlp_kernel(%arg0: i32, %arg1: memref<16x64xbf16, #tpu.memory_space<vmem>>, %arg2: memref<64x32xbf16, #tpu.memory_space<vmem>>, %arg3: memref<1x32xf32, #tpu.memory_space<vmem>>, %arg4: memref<32x16xbf16, #tpu.memory_space<vmem>>, %arg5: memref<1x16xf32, #tpu.memory_space<vmem>>, %arg6: memref<1x16xbf16, #tpu.memory_space<vmem>>, %arg7: memref<1x1xf32, #tpu.memory_space<vmem>>, %arg8: memref<16x1xf32, #tpu.memory_space<vmem>>) attributes {dimension_semantics = [#tpu.dimension_semantics<parallel>], iteration_bounds = array<i64: 1>, scalar_prefetch = 0 : i64, scratch_operands = 0 : i64, tpu.core_type = #tpu.core_type<tc>, window_params = [{transform_indices = @transform_0, window_bounds = array<i64: 16, 64>}, {pipeline_mode = #tpu.pipeline_mode<synchronous>, transform_indices = @transform_1, window_bounds = array<i64: 64, 32>}, {pipeline_mode = #tpu.pipeline_mode<synchronous>, transform_indices = @transform_2, window_bounds = array<i64: 1, 32>}, {pipeline_mode = #tpu.pipeline_mode<synchronous>, transform_indices = @transform_3, window_bounds = array<i64: 32, 16>}, {pipeline_mode = #tpu.pipeline_mode<synchronous>, transform_indices = @transform_4, window_bounds = array<i64: 1, 16>}, {pipeline_mode = #tpu.pipeline_mode<synchronous>, transform_indices = @transform_5, window_bounds = array<i64: 1, 16>}, {pipeline_mode = #tpu.pipeline_mode<synchronous>, transform_indices = @transform_6, window_bounds = array<i64: 1, 1>}, {transform_indices = @transform_7, window_bounds = array<i64: 16, 1>}]} {
    %c0 = arith.constant 0 : index
    %c0_0 = arith.constant 0 : index
    %0 = vector.load %arg1[%c0, %c0_0] : memref<16x64xbf16, #tpu.memory_space<vmem>>, vector<16x64xbf16>
    %c0_1 = arith.constant 0 : index
    %c0_2 = arith.constant 0 : index
    %1 = vector.load %arg2[%c0_1, %c0_2] : memref<64x32xbf16, #tpu.memory_space<vmem>>, vector<64x32xbf16>
    %cst = arith.constant dense<0.000000e+00> : vector<16x32xf32>
    %2 = tpu.matmul %0, %1, %cst {dimension_numbers = #tpu.dot_dimension_numbers<[1], [0], [0], [1], [0, 0, 1, 1], [], []>} : vector<16x64xbf16>, vector<64x32xbf16>, vector<16x32xf32> -> vector<16x32xf32>
    %c0_3 = arith.constant 0 : index
    %c0_4 = arith.constant 0 : index
    %3 = vector.load %arg3[%c0_3, %c0_4] : memref<1x32xf32, #tpu.memory_space<vmem>>, vector<1x32xf32>
    %4 = vector.broadcast %3 : vector<1x32xf32> to vector<16x32xf32>
    %5 = arith.addf %2, %4 : vector<16x32xf32>
    %cst_5 = arith.constant 0.000000e+00 : f32
    %6 = vector.broadcast %cst_5 : f32 to vector<16x32xf32>
    %7 = arith.maximumf %5, %6 : vector<16x32xf32>
    %8 = arith.truncf %7 : vector<16x32xf32> to vector<16x32xbf16>
    %c0_6 = arith.constant 0 : index
    %c0_7 = arith.constant 0 : index
    %9 = vector.load %arg4[%c0_6, %c0_7] : memref<32x16xbf16, #tpu.memory_space<vmem>>, vector<32x16xbf16>
    %cst_8 = arith.constant dense<0.000000e+00> : vector<16x16xf32>
    %10 = tpu.matmul %8, %9, %cst_8 {dimension_numbers = #tpu.dot_dimension_numbers<[1], [0], [0], [1], [0, 0, 1, 1], [], []>} : vector<16x32xbf16>, vector<32x16xbf16>, vector<16x16xf32> -> vector<16x16xf32>
    %c0_9 = arith.constant 0 : index
    %c0_10 = arith.constant 0 : index
    %11 = vector.load %arg5[%c0_9, %c0_10] : memref<1x16xf32, #tpu.memory_space<vmem>>, vector<1x16xf32>
    %12 = vector.broadcast %11 : vector<1x16xf32> to vector<16x16xf32>
    %13 = arith.addf %10, %12 : vector<16x16xf32>
    %cst_11 = arith.constant 0.000000e+00 : f32
    %14 = vector.broadcast %cst_11 : f32 to vector<16x16xf32>
    %15 = arith.maximumf %13, %14 : vector<16x16xf32>
    %c0_12 = arith.constant 0 : index
    %c0_13 = arith.constant 0 : index
    %16 = vector.load %arg6[%c0_12, %c0_13] : memref<1x16xbf16, #tpu.memory_space<vmem>>, vector<1x16xbf16>
    %17 = arith.extf %16 : vector<1x16xbf16> to vector<1x16xf32>
    %18 = vector.broadcast %17 : vector<1x16xf32> to vector<16x16xf32>
    %19 = arith.mulf %15, %18 : vector<16x16xf32>
    %cst_14 = arith.constant dense<0.000000e+00> : vector<16xf32>
    %20 = vector.multi_reduction <add>, %19, %cst_14 [1] : vector<16x16xf32> to vector<16xf32>
    %21 = vector.shape_cast %20 : vector<16xf32> to vector<16x1xf32>
    %c0_15 = arith.constant 0 : index
    %c0_16 = arith.constant 0 : index
    %22 = vector.load %arg7[%c0_15, %c0_16] : memref<1x1xf32, #tpu.memory_space<vmem>>, vector<1x1xf32>
    %23 = vector.broadcast %22 : vector<1x1xf32> to vector<16x1xf32>
    %24 = arith.addf %21, %23 : vector<16x1xf32>
    %c0_17 = arith.constant 0 : index
    %c0_18 = arith.constant 0 : index
    %25 = vector.load %arg8[%c0_17, %c0_18] : memref<16x1xf32, #tpu.memory_space<vmem>>, vector<16x1xf32>
    tpu.vector_store %arg8[%c0_17, %c0_18], %24 {strides = array<i32>} : memref<16x1xf32, #tpu.memory_space<vmem>>, vector<16x1xf32>,
    return
  }
  func.func @transform_0(%arg0: i32) -> (i32, i32) {
    %c0_i32 = arith.constant 0 : i32
    %c0_i32_0 = arith.constant 0 : i32
    return %arg0, %c0_i32 : i32, i32
  }
  func.func @transform_1(%arg0: i32) -> (i32, i32) {
    %c0_i32 = arith.constant 0 : i32
    %c0_i32_0 = arith.constant 0 : i32
    %c0_i32_1 = arith.constant 0 : i32
    return %c0_i32, %c0_i32_0 : i32, i32
  }
  func.func @transform_2(%arg0: i32) -> (i32, i32) {
    %c0_i32 = arith.constant 0 : i32
    %c0_i32_0 = arith.constant 0 : i32
    %c0_i32_1 = arith.constant 0 : i32
    return %c0_i32, %c0_i32_0 : i32, i32
  }
  func.func @transform_3(%arg0: i32) -> (i32, i32) {
    %c0_i32 = arith.constant 0 : i32
    %c0_i32_0 = arith.constant 0 : i32
    %c0_i32_1 = arith.constant 0 : i32
    return %c0_i32, %c0_i32_0 : i32, i32
  }
  func.func @transform_4(%arg0: i32) -> (i32, i32) {
    %c0_i32 = arith.constant 0 : i32
    %c0_i32_0 = arith.constant 0 : i32
    %c0_i32_1 = arith.constant 0 : i32
    return %c0_i32, %c0_i32_0 : i32, i32
  }
  func.func @transform_5(%arg0: i32) -> (i32, i32) {
    %c0_i32 = arith.constant 0 : i32
    %c0_i32_0 = arith.constant 0 : i32
    %c0_i32_1 = arith.constant 0 : i32
    return %c0_i32, %c0_i32_0 : i32, i32
  }
  func.func @transform_6(%arg0: i32) -> (i32, i32) {
    %c0_i32 = arith.constant 0 : i32
    %c0_i32_0 = arith.constant 0 : i32
    %c0_i32_1 = arith.constant 0 : i32
    return %c0_i32, %c0_i32_0 : i32, i32
  }
  func.func @transform_7(%arg0: i32) -> (i32, i32) {
    %c0_i32 = arith.constant 0 : i32
    %c0_i32_0 = arith.constant 0 : i32
    return %arg0, %c0_i32 : i32, i32
  }
}

</mosaic_0001>

<llo_original>
// kernel: tpu_custom_call.1
$region0: #{tpu_custom_call.1}
  #allocation0 [shape = 'u32[]', space=smem, size = 0x4, offset = 0x4, fixed_abs, tag = 'smem constant byte address 0x4 - core index']
  #allocation1 [shape = 'u32[144,128]{1,0:T(1,128)}', space=vmem, size = 0x12000, scoped, tag = 'internal scratch']
  #allocation2 [shape = 'f32[1,1]{1,0:T(1,128)S(1)}', space=vmem, size = 0x200, scoped, tag = 'scoped memory for tpu_custom_call.1']
  %s0 = inlined_call_operand.vmem [shape: bf16[16,64], index: 0, kind: input, shape index: {}]
  %s1 = inlined_call_operand.vmem [shape: bf16[64,32], index: 1, kind: input, shape index: {}]
  %s2 = inlined_call_operand.vmem [shape: f32[1,32], index: 2, kind: input, shape index: {}]
  %s3 = inlined_call_operand.vmem [shape: bf16[32,16], index: 3, kind: input, shape index: {}]
  %s4 = inlined_call_operand.vmem [shape: f32[1,16], index: 4, kind: input, shape index: {}]
  %s5 = inlined_call_operand.vmem [shape: bf16[1,16], index: 5, kind: input, shape index: {}]
  %s6 = inlined_call_operand.<no memory space> [shape: f32[1,1], index: 6, kind: input, shape index: {}]
  %s7 = inlined_call_operand.vmem [shape: f32[16,1], index: 7, kind: output, shape index: {}]
  %s8 = sld [smem:[#allocation0]]
  $region38: #{tpu_custom_call.1} parent=0
    _
  %s10 = ssub.s32 1, %s8
  %s11 = scalar_select 0, %s10, %s8
  %v12 = vstv %s6
  %13 = vst [vmem:[#allocation2] sm:$0x1] %v12
  // Predicated region
  $region2: #{tpu_custom_call.1} parent=0 // pred_check
    _
  $region3: #{tpu_custom_call.1} parent=0 // pred_check_branch
    %15 = sbr.rel (0) target = $region5
  $region4: #{tpu_custom_call.1} parent=0 // pred_region
    _
  $region5: #{tpu_custom_call.1} parent=0 // pred_fallthru
    _
  // Predicated region
  $region6: #{tpu_custom_call.1} parent=0 // pred_check
    _
  $region7: #{tpu_custom_call.1} parent=0 // pred_check_branch
    %17 = sbr.rel (0) target = $region9
  $region8: #{tpu_custom_call.1} parent=0 // pred_region
    _
  $region9: #{tpu_custom_call.1} parent=0 // pred_fallthru
    _
  // Predicated region
  $region10: #{tpu_custom_call.1} parent=0 // pred_check
    _
  $region11: #{tpu_custom_call.1} parent=0 // pred_check_branch
    %19 = sbr.rel (0) target = $region13
  $region12: #{tpu_custom_call.1} parent=0 // pred_region
    _
  $region13: #{tpu_custom_call.1} parent=0 // pred_fallthru
    _
  // Predicated region
  $region14: #{tpu_custom_call.1} parent=0 // pred_check
    _
  $region15: #{tpu_custom_call.1} parent=0 // pred_check_branch
    %21 = sbr.rel (0) target = $region17
  $region16: #{tpu_custom_call.1} parent=0 // pred_region
    _
  $region17: #{tpu_custom_call.1} parent=0 // pred_fallthru
    _
  // Predicated region
  $region18: #{tpu_custom_call.1} parent=0 // pred_check
    _
  $region19: #{tpu_custom_call.1} parent=0 // pred_check_branch
    %23 = sbr.rel (0) target = $region21
  $region20: #{tpu_custom_call.1} parent=0 // pred_region
    _
  $region21: #{tpu_custom_call.1} parent=0 // pred_fallthru
    _
  // Predicated region
  $region22: #{tpu_custom_call.1} parent=0 // pred_check
    _
  $region23: #{tpu_custom_call.1} parent=0 // pred_check_branch
    %25 = sbr.rel (0) target = $region25
  $region24: #{tpu_custom_call.1} parent=0 // pred_region
    _
  $region25: #{tpu_custom_call.1} parent=0 // pred_fallthru
    _
  // Predicated region
  $region26: #{tpu_custom_call.1} parent=0 // pred_check
    _
  $region27: #{tpu_custom_call.1} parent=0 // pred_check_branch
    %27 = sbr.rel (0) target = $region29
  $region28: #{tpu_custom_call.1} parent=0 // pred_region
    _
  $region29: #{tpu_custom_call.1} parent=0 // pred_fallthru
    _
  %v29 = vld [vmem:[%s0] sm:$0xf]
  %v30 = vld [vmem:[%s0 + $0x4] sm:$0xf]
  %v31 = vld [vmem:[%s1] sm:$0xf]
  %v32 = vld [vmem:[%s1 + $0x4] sm:$0xf]
  %v33 = vld [vmem:[%s1 + $0x8] sm:$0xf]
  %v34 = vld [vmem:[%s1 + $0xc] sm:$0xf]
  %v35 = vld [vmem:[%s1 + $0x10] sm:$0xf]
  %v36 = vld [vmem:[%s1 + $0x14] sm:$0xf]
  %v37 = vld [vmem:[%s1 + $0x18] sm:$0xf]
  %v38 = vld [vmem:[%s1 + $0x1c] sm:$0xf]
  %v39 = vld [vmem:[%s2] sm:$0x1]
  %v41 = vlaneseq
  %v42 = vshrl.u32 %v41, 7
  %v43 = vsub.s32 0, %v42
  %v44 = vrot.slane %v39, %v43
  %v48 = vunpack.c.l.b16 %v29
  %v49 = vunpack.c.l.b16 %v30
  %v50 = vpack.c.b16 %v49, %v48
  %v59 = vunpack.c.l.b16 %v31
  %v60 = vunpack.c.l.b16 %v32
  %v61 = vunpack.c.l.b16 %v33
  %v62 = vunpack.c.l.b16 %v34
  %v63 = vunpack.c.l.b16 %v35
  %v64 = vunpack.c.l.b16 %v36
  %v65 = vunpack.c.l.b16 %v37
  %v66 = vunpack.c.l.b16 %v38
  %v67 = vpack.c.b16 %v60, %v59
  %v68 = vpack.c.b16 %v62, %v61
  %v69 = vpack.c.b16 %v64, %v63
  %v70 = vpack.c.b16 %v66, %v65
  %vm75 = vcmask 523264
  %v77 = vsel %vm75, %v50, 0
  %79 = vmatprep.subr.bf16.mxu0 0
  %80 = vmatpush1.bf16.msra.mxu0 0
  %81 = vmatprep.subr.bf16.mxu0 0
  %82 = vmatpush1.bf16.msra.mxu0 0
  %83 = vmatprep.subr.bf16.mxu0 0
  %84 = vmatpush1.bf16.msra.mxu0 0
  %85 = vmatprep.subr.bf16.mxu0 0
  %86 = vmatpush1.bf16.msra.mxu0 0
  %87 = vmatprep.subr.bf16.mxu0 0
  %88 = vmatpush1.bf16.msra.mxu0 %v70
  %89 = vmatprep.subr.bf16.mxu0 0
  %90 = vmatpush1.bf16.msra.mxu0 %v69
  %91 = vmatprep.subr.bf16.mxu0 0
  %92 = vmatpush1.bf16.msra.mxu0 %v68
  %93 = vmatprep.subr.bf16.mxu0 0
  %94 = vmatpush1.bf16.msra.mxu0 %v67
  %95 = vmatprep.subr.bf16.mxu0 0
  %96 = vmatpush2.bf16.msra.mxu0 0
  %97 = vmatprep.subr.bf16.mxu0 0
  %98 = vmatpush2.bf16.msra.mxu0 0
  %99 = vmatprep.subr.bf16.mxu0 0
  %100 = vmatpush2.bf16.msra.mxu0 0
  %101 = vmatprep.subr.bf16.mxu0 0
  %102 = vmatpush2.bf16.msra.mxu0 0
  %103 = vmatprep.subr.bf16.mxu0 0
  %104 = vmatpush2.bf16.msra.mxu0 0
  %105 = vmatprep.subr.bf16.mxu0 0
  %106 = vmatpush2.bf16.msra.mxu0 0
  %107 = vmatprep.subr.bf16.mxu0 0
  %108 = vmatpush2.bf16.msra.mxu0 0
  %109 = vmatprep.subr.bf16.mxu0 0
  %110 = vmatpush2.bf16.msra.mxu0 0
  %111 = vmatprep.mubr.bf16.mxu0 0
  %112 = vmatmul.mubr.bf16.gmra.mxu0 %v77
  %v113 = vpop.f32.mrf.mxu0
  %v114 = vadd.f32 %v44, %v113
  %v115 = vpop.f32.mrf.mxu0
  %v116 = vpop.f32.mrf.mxu0
  %v117 = vadd.f32 %v44, %v116
  %v118 = vpop.f32.mrf.mxu0
  %119 = vdwg.mxu0
  %v120 = vmax.f32 %v114, 0.0
  %v121 = vmax.f32 %v117, 0.0
  %v122 = vpack.c.bf16 %v121, %v120
  %v123 = vld [vmem:[%s3] sm:$0xf]
  %v124 = vld [vmem:[%s3 + $0x4] sm:$0xf]
  %v125 = vld [vmem:[%s3 + $0x8] sm:$0xf]
  %v126 = vld [vmem:[%s3 + $0xc] sm:$0xf]
  %v127 = vld [vmem:[%s4] sm:$0x1]
  %v129 = vlaneseq
  %v130 = vshrl.u32 %v129, 7
  %v131 = vsub.s32 0, %v130
  %v132 = vrot.slane %v127, %v131
  %v138 = vunpack.c.l.b16 %v123
  %v139 = vunpack.c.l.b16 %v124
  %v140 = vunpack.c.l.b16 %v125
  %v141 = vunpack.c.l.b16 %v126
  %v142 = vpack.c.b16 %v139, %v138
  %v143 = vpack.c.b16 %v141, %v140
  %vm146 = vcmask 261120
  %v148 = vsel %vm146, %v122, 0
  %150 = vmatprep.subr.bf16.mxu0 0
  %151 = vmatpush1.bf16.msra.mxu0 0
  %152 = vmatprep.subr.bf16.mxu0 0
  %153 = vmatpush1.bf16.msra.mxu0 0
  %154 = vmatprep.subr.bf16.mxu0 0
  %155 = vmatpush1.bf16.msra.mxu0 0
  %156 = vmatprep.subr.bf16.mxu0 0
  %157 = vmatpush1.bf16.msra.mxu0 0
  %158 = vmatprep.subr.bf16.mxu0 0
  %159 = vmatpush1.bf16.msra.mxu0 0
  %160 = vmatprep.subr.bf16.mxu0 0
  %161 = vmatpush1.bf16.msra.mxu0 0
  %162 = vmatprep.subr.bf16.mxu0 0
  %163 = vmatpush1.bf16.msra.mxu0 %v143
  %164 = vmatprep.subr.bf16.mxu0 0
  %165 = vmatpush1.bf16.msra.mxu0 %v142
  %166 = vmatprep.subr.bf16.mxu0 0
  %167 = vmatpush2.bf16.msra.mxu0 0
  %168 = vmatprep.subr.bf16.mxu0 0
  %169 = vmatpush2.bf16.msra.mxu0 0
  %170 = vmatprep.subr.bf16.mxu0 0
  %171 = vmatpush2.bf16.msra.mxu0 0
  %172 = vmatprep.subr.bf16.mxu0 0
  %173 = vmatpush2.bf16.msra.mxu0 0
  %174 = vmatprep.subr.bf16.mxu0 0
  %175 = vmatpush2.bf16.msra.mxu0 0
  %176 = vmatprep.subr.bf16.mxu0 0
  %177 = vmatpush2.bf16.msra.mxu0 0
  %178 = vmatprep.subr.bf16.mxu0 0
  %179 = vmatpush2.bf16.msra.mxu0 0
  %180 = vmatprep.subr.bf16.mxu0 0
  %181 = vmatpush2.bf16.msra.mxu0 0
  %182 = vmatprep.mubr.bf16.mxu0 0
  %183 = vmatmul.mubr.bf16.gmra.mxu0 %v148
  %v184 = vpop.f32.mrf.mxu0
  %v185 = vadd.f32 %v132, %v184
  %v186 = vpop.f32.mrf.mxu0
  %v187 = vpop.f32.mrf.mxu0
  %v188 = vadd.f32 %v132, %v187
  %v189 = vpop.f32.mrf.mxu0
  %190 = vdwg.mxu0
  %v191 = vmax.f32 %v185, 0.0
  %v192 = vmax.f32 %v188, 0.0
  %v193 = vld [vmem:[%s5] sm:$0x1]
  %v194 = vunpack.c.l.bf16 %v193
  %v195 = vlaneseq
  %v196 = vshrl.u32 %v195, 7
  %v197 = vsub.s32 0, %v196
  %v198 = vrot.slane %v194, %v197
  %v199 = vmul.f32 %v191, %v198
  %v200 = vmul.f32 %v192, %v198
  %vm201 = vcmask 130048
  %v202 = vsel %vm201, %v199, 0.0
  %203 = vadd.xlane.f32.xlu0 %v202
  %v204 = vpop.xlane.xlu0 %203
  %v205 = vsel %vm201, %v200, 0.0
  %206 = vadd.xlane.f32.xlu0 %v205
  %v207 = vpop.xlane.xlu0 %206
  %v208 = vld [vmem:[#allocation2] sm:$0x1]
  %v210 = vlaneseq
  %v211 = vshrl.u32 %v210, 7
  %v212 = vsub.s32 0, %v211
  %v213 = vrot.slane %v208, %v212
  %v215 = vadd.f32 %v204, %v213
  %v216 = vadd.f32 %v207, %v213
  %vm217 = vcmask 7168
  %218 = vst.msk [vmem:[%s7] sm:$0xff] %vm217, %v215
  %219 = vst.msk [vmem:[%s7 + $0x8] sm:$0xff] %vm217, %v216
  // Predicated region
  $region30: #{tpu_custom_call.1} parent=0 // pred_check
    _
  $region31: #{tpu_custom_call.1} parent=0 // pred_check_branch
    %221 = sbr.rel (0) target = $region33
  $region32: #{tpu_custom_call.1} parent=0 // pred_region
    _
  $region33: #{tpu_custom_call.1} parent=0 // pred_fallthru
    _
  // Predicated region
  $region34: #{tpu_custom_call.1} parent=0 // pred_check
    _
  $region35: #{tpu_custom_call.1} parent=0 // pred_check_branch
    %223 = sbr.rel (0) target = $region37
  $region36: #{tpu_custom_call.1} parent=0 // pred_region
    _
  $region37: #{tpu_custom_call.1} parent=0 // pred_fallthru
    _

</llo_original>
